<compile_context>
chip_gen: v7x
topology: tpu7x:2x2x1
jax: 0.10.0
libtpu: 0.0.40
codegen_flags: <defaults>
</compile_context>

<pallas_src>
import numpy as np
import jax
import jax.numpy as jnp
from jax.experimental import pallas as pl
from jax.experimental.pallas import tpu as pltpu


# ----------------------------- parameter construction (glue) -----------------------------

def _round_up(x, m):
    return ((x + m - 1) // m) * m


def _hann_window(n_fft):
    n = np.arange(n_fft, dtype=np.float64)
    return 0.5 * (1.0 - np.cos(2.0 * np.pi * n / n_fft))   # torch.hann_window(periodic=True)


def _melscale_fbanks(n_freqs, f_min, f_max, n_mels, sample_rate):
    """torchaudio.functional.melscale_fbanks (norm=None, mel_scale='htk') -> (n_freqs, n_mels)."""
    all_freqs = np.linspace(0.0, sample_rate / 2.0, n_freqs)
    hz2mel = lambda f: 2595.0 * np.log10(1.0 + f / 700.0)
    mel2hz = lambda m: 700.0 * (10.0 ** (m / 2595.0) - 1.0)
    m_pts = np.linspace(hz2mel(f_min), hz2mel(f_max), n_mels + 2)
    f_pts = mel2hz(m_pts)
    f_diff = f_pts[1:] - f_pts[:-1]
    slopes = f_pts[None, :] - all_freqs[:, None]
    down = -slopes[:, :-2] / f_diff[:-1]
    up = slopes[:, 2:] / f_diff[1:]
    return np.maximum(0.0, np.minimum(down, up))            # (n_freqs, n_mels)


def _packed_dft_and_fb(n_fft, n_mels, f_min, f_max, sample_rate):
    """Packed windowed one-sided DFT matrix and permuted mel filterbank.

    W  : (n_fft, K_pad)   columns = [re_0..re_{F-1} | im_1..im_{F-2}]  (im of DC/Nyquist == 0)
    FB : (K_pad, n_mels)  row j carries fb[k(j), :] so (xW)^2 @ FB == fb @ (re^2 + im^2)
    Padded columns/rows are zero.
    """
    n_freqs = n_fft // 2 + 1
    win = _hann_window(n_fft)
    n = np.arange(n_fft, dtype=np.float64)[:, None]

    k_re = np.arange(n_freqs)
    k_im = np.arange(1, n_freqs - 1) if n_fft % 2 == 0 else np.arange(1, n_freqs)
    n_re = len(k_re)
    K_packed = n_re + len(k_im)                 # == n_fft when n_fft is even
    K_pad = _round_up(max(K_packed, 128), 128)

    W = np.zeros((n_fft, K_pad), dtype=np.float64)
    W[:, :n_re] = win[:, None] * np.cos(2.0 * np.pi * n * k_re[None, :].astype(np.float64) / n_fft)
    W[:, n_re:K_packed] = -(win[:, None] *
                            np.sin(2.0 * np.pi * n * k_im[None, :].astype(np.float64) / n_fft))

    fb = _melscale_fbanks(n_freqs, f_min, f_max, n_mels, sample_rate)
    FB = np.zeros((K_pad, n_mels), dtype=np.float64)
    FB[:n_re, :] = fb[k_re, :]
    FB[n_re:K_packed, :] = fb[k_im, :]
    return W.astype(np.float32), FB.astype(np.float32)


# ----------------------------------- Pallas kernel -------------------------------------

def _mel_db_kernel(a_ref, h_ref, wt_ref, wb_ref, fb_ref, out_ref):
    # a_ref : (1, tile, hop)  bf16  chunk rows [j*tile, (j+1)*tile)       of batch b
    # h_ref : (1, 16,  hop)   bf16  halo: chunk rows [(j+1)*tile, +16)    (only row 0 used)
    # wt/wb : (hop, K_pad)    bf16  top/bottom halves of the packed windowed DFT matrix
    # fb    : (K_pad, n_mels) f32   permuted mel filterbank
    # out   : (1, tile, n_mels) f32
    x = a_ref[0]                                                      # (tile, hop) bf16
    h = h_ref[0]                                                      # (16,  hop) bf16
    zt = jnp.dot(x, wt_ref[...], preferred_element_type=jnp.float32)  # (tile, K) f32
    zb = jnp.dot(x, wb_ref[...], preferred_element_type=jnp.float32)  # (tile, K) f32
    zh = jnp.dot(h, wb_ref[...], preferred_element_type=jnp.float32)  # (16,  K) f32

    # frame f = [chunk_f ; chunk_{f+1}]  ->  z[f] = zt[f] + zb[f+1]; last frame uses halo row 0.
    zb_next = jnp.concatenate([zb[1:, :], zh[:1, :]], axis=0)         # (tile, K)
    z = zt + zb_next
    power = z * z                                                     # packed re^2 / im^2 lanes
    mel = jnp.dot(power, fb_ref[...], preferred_element_type=jnp.float32)  # (tile, n_mels) f32
    # AmplitudeToDB('power', top_db=None): 10*log10(clamp(x, 1e-10))
    out_ref[0] = 10.0 * jnp.log10(jnp.maximum(mel, 1e-10))


def custom_mfcc(waveform, *, sample_rate=16000, n_fft=128, hop_length=64, n_mels=32,
                f_min=0.0, f_max=None, frame_tile_cap=1024):
    """waveform: (B, T) float32  ->  (B, n_mels, n_frames) float32 (mel spectrogram in dB)."""
    waveform = jnp.asarray(waveform, jnp.float32)
    B, T = waveform.shape
    f_max = f_max if f_max is not None else sample_rate / 2.0
    hop = hop_length
    pad = n_fft // 2
    if n_fft != 2 * hop:
        # TODO(synk): general hop would need r = n_fft//hop shifted partial matmuls in-kernel.
        raise NotImplementedError("in-kernel framing assumes n_fft == 2*hop_length")
    assert T > pad + 2, "reflect padding needs T > n_fft//2"

    n_frames = 1 + T // hop

    # Balanced frame tiles: multiple of 16 (bf16 sublane packing), capped, ~equal sizes so row
    # padding stays tiny even when n_frames is just above a tile multiple.
    n_ftiles = max(1, (n_frames + frame_tile_cap - 1) // frame_tile_cap)
    tile = _round_up((n_frames + n_ftiles - 1) // n_ftiles, 16)
    n_ftiles = (n_frames + tile - 1) // tile
    F_pad = n_ftiles * tile
    C_pad = F_pad + 16                               # halo room for the last tile

    # --- glue: build the bf16 hop-chunk slab in ONE concatenate (no gather, no frame dup) ---
    #   padded = [reflect-left(pad) | wav | reflect-right(pad) | zeros]  -> (B, C_pad, hop)
    wav16 = waveform.astype(jnp.bfloat16)
    left = wav16[:, pad:0:-1]                         # wav[pad], ..., wav[1]
    right = wav16[:, -2:-(pad + 2):-1]                # wav[T-2], ..., wav[T-pad-1]
    extra = C_pad * hop - (T + 2 * pad)
    tail = jnp.zeros((B, extra), jnp.bfloat16)
    chunks = jnp.concatenate([left, wav16, right, tail], axis=1).reshape(B, C_pad, hop)

    # --- constant operands (deterministic, computed in-script) ---
    W_np, FB_np = _packed_dft_and_fb(n_fft, n_mels, f_min, f_max, sample_rate)
    K_pad = W_np.shape[1]
    wt = jnp.asarray(W_np[:hop, :], jnp.bfloat16)     # (hop, K_pad)
    wb = jnp.asarray(W_np[hop:, :], jnp.bfloat16)     # (hop, K_pad)
    fb = jnp.asarray(FB_np, jnp.float32)              # (K_pad, n_mels)

    # --- hot path: in-kernel framing + packed DFT matmul + square + mel matmul + log10 ---
    out3 = pl.pallas_call(
        _mel_db_kernel,
        out_shape=jax.ShapeDtypeStruct((B, F_pad, n_mels), jnp.float32),
        grid_spec=pltpu.PrefetchScalarGridSpec(
            num_scalar_prefetch=0,
            grid=(B, n_ftiles),
            in_specs=[
                # chunk rows of this tile
                pl.BlockSpec((1, tile, hop), lambda b, j: (b, j, 0)),
                # 16-row halo at the start of the next tile (same array, second view)
                pl.BlockSpec((1, 16, hop), lambda b, j: (b, (j + 1) * (tile // 16), 0)),
                # constant blocks: fetched once (index never changes)
                pl.BlockSpec((hop, K_pad), lambda b, j: (0, 0)),
                pl.BlockSpec((hop, K_pad), lambda b, j: (0, 0)),
                pl.BlockSpec((K_pad, n_mels), lambda b, j: (0, 0)),
            ],
            out_specs=pl.BlockSpec((1, tile, n_mels), lambda b, j: (b, j, 0)),
        ),
        compiler_params=pltpu.CompilerParams(
            dimension_semantics=("parallel", "parallel")),
    )(chunks, chunks, wt, wb, fb)

    # --- glue: drop padded frames, back to torch layout (..., n_mels, time) ---
    return jnp.transpose(out3[:, :n_frames, :], (0, 2, 1))


if __name__ == "__main__":
    key = jax.random.PRNGKey(0)
    B, T = 2, 512                                     # small waveform (B, time)
    waveform = jax.random.normal(key, (B, T), dtype=jnp.float32)

    out = custom_mfcc(waveform, sample_rate=16000, n_fft=128, hop_length=64, n_mels=32)
    out = jax.block_until_ready(out)

    expected_frames = 1 + T // 64
    assert out.shape == (B, 32, expected_frames), out.shape
    assert out.dtype == jnp.float32
    assert bool(jnp.all(jnp.isfinite(out)))
    print("KERNEL_OK")
</pallas_src>

<mosaic_0001>
module attributes {stable_mosaic.version = 11 : i64} {
  func.func @_mel_db_kernel(%arg0: i32, %arg1: i32, %arg2: memref<1x16x64xbf16, #tpu.memory_space<vmem>>, %arg3: memref<1x16x64xbf16, #tpu.memory_space<vmem>>, %arg4: memref<64x128xbf16, #tpu.memory_space<vmem>>, %arg5: memref<64x128xbf16, #tpu.memory_space<vmem>>, %arg6: memref<128x32xf32, #tpu.memory_space<vmem>>, %arg7: memref<1x16x32xf32, #tpu.memory_space<vmem>>) attributes {dimension_semantics = [#tpu.dimension_semantics<parallel>, #tpu.dimension_semantics<parallel>], iteration_bounds = array<i64: 2, 1>, scalar_prefetch = 0 : i64, scratch_operands = 0 : i64, tpu.core_type = #tpu.core_type<tc>, window_params = [{transform_indices = @transform_0, window_bounds = array<i64: 1, 16, 64>}, {transform_indices = @transform_1, window_bounds = array<i64: 1, 16, 64>}, {pipeline_mode = #tpu.pipeline_mode<synchronous>, transform_indices = @transform_2, window_bounds = array<i64: 64, 128>}, {pipeline_mode = #tpu.pipeline_mode<synchronous>, transform_indices = @transform_3, window_bounds = array<i64: 64, 128>}, {pipeline_mode = #tpu.pipeline_mode<synchronous>, transform_indices = @transform_4, window_bounds = array<i64: 128, 32>}, {transform_indices = @transform_5, window_bounds = array<i64: 1, 16, 32>}]} {
    %c0 = arith.constant 0 : index
    %c0_0 = arith.constant 0 : index
    %c0_1 = arith.constant 0 : index
    %0 = vector.load %arg2[%c0, %c0_0, %c0_1] : memref<1x16x64xbf16, #tpu.memory_space<vmem>>, vector<1x16x64xbf16>
    %1 = vector.shape_cast %0 : vector<1x16x64xbf16> to vector<16x64xbf16>
    %c0_2 = arith.constant 0 : index
    %c0_3 = arith.constant 0 : index
    %c0_4 = arith.constant 0 : index
    %2 = vector.load %arg3[%c0_2, %c0_3, %c0_4] : memref<1x16x64xbf16, #tpu.memory_space<vmem>>, vector<1x16x64xbf16>
    %3 = vector.shape_cast %2 : vector<1x16x64xbf16> to vector<16x64xbf16>
    %c0_5 = arith.constant 0 : index
    %c0_6 = arith.constant 0 : index
    %4 = vector.load %arg4[%c0_5, %c0_6] : memref<64x128xbf16, #tpu.memory_space<vmem>>, vector<64x128xbf16>
    %cst = arith.constant dense<0.000000e+00> : vector<16x128xf32>
    %5 = tpu.matmul %1, %4, %cst {dimension_numbers = #tpu.dot_dimension_numbers<[1], [0], [0], [1], [0, 0, 1, 1], [], []>} : vector<16x64xbf16>, vector<64x128xbf16>, vector<16x128xf32> -> vector<16x128xf32>
    %c0_7 = arith.constant 0 : index
    %c0_8 = arith.constant 0 : index
    %6 = vector.load %arg5[%c0_7, %c0_8] : memref<64x128xbf16, #tpu.memory_space<vmem>>, vector<64x128xbf16>
    %cst_9 = arith.constant dense<0.000000e+00> : vector<16x128xf32>
    %7 = tpu.matmul %1, %6, %cst_9 {dimension_numbers = #tpu.dot_dimension_numbers<[1], [0], [0], [1], [0, 0, 1, 1], [], []>} : vector<16x64xbf16>, vector<64x128xbf16>, vector<16x128xf32> -> vector<16x128xf32>
    %c0_10 = arith.constant 0 : index
    %c0_11 = arith.constant 0 : index
    %8 = vector.load %arg5[%c0_10, %c0_11] : memref<64x128xbf16, #tpu.memory_space<vmem>>, vector<64x128xbf16>
    %cst_12 = arith.constant dense<0.000000e+00> : vector<16x128xf32>
    %9 = tpu.matmul %3, %8, %cst_12 {dimension_numbers = #tpu.dot_dimension_numbers<[1], [0], [0], [1], [0, 0, 1, 1], [], []>} : vector<16x64xbf16>, vector<64x128xbf16>, vector<16x128xf32> -> vector<16x128xf32>
    %10 = vector.extract_strided_slice %7 {offsets = [1, 0], sizes = [15, 128], strides = [1, 1]} : vector<16x128xf32> to vector<15x128xf32>
    %11 = vector.extract_strided_slice %9 {offsets = [0, 0], sizes = [1, 128], strides = [1, 1]} : vector<16x128xf32> to vector<1x128xf32>
    %12 = tpu.concatenate %10, %11 in 0 : vector<15x128xf32>, vector<1x128xf32> -> vector<16x128xf32>
    %13 = arith.addf %5, %12 : vector<16x128xf32>
    %14 = arith.mulf %13, %13 : vector<16x128xf32>
    %c0_13 = arith.constant 0 : index
    %c0_14 = arith.constant 0 : index
    %15 = vector.load %arg6[%c0_13, %c0_14] : memref<128x32xf32, #tpu.memory_space<vmem>>, vector<128x32xf32>
    %cst_15 = arith.constant dense<0.000000e+00> : vector<16x32xf32>
    %16 = tpu.matmul %14, %15, %cst_15 {dimension_numbers = #tpu.dot_dimension_numbers<[1], [0], [0], [1], [0, 0, 1, 1], [], []>} : vector<16x128xf32>, vector<128x32xf32>, vector<16x32xf32> -> vector<16x32xf32>
    %cst_16 = arith.constant 1.000000e-10 : f32
    %17 = vector.broadcast %cst_16 : f32 to vector<16x32xf32>
    %18 = arith.maximumf %16, %17 : vector<16x32xf32>
    %19 = math.log %18 : vector<16x32xf32>
    %cst_17 = arith.constant 0.434294492 : f32
    %20 = vector.broadcast %cst_17 : f32 to vector<16x32xf32>
    %21 = arith.mulf %19, %20 : vector<16x32xf32>
    %cst_18 = arith.constant 1.000000e+01 : f32
    %22 = vector.broadcast %cst_18 : f32 to vector<16x32xf32>
    %23 = arith.mulf %22, %21 : vector<16x32xf32>
    %c0_19 = arith.constant 0 : index
    %c0_20 = arith.constant 0 : index
    %c0_21 = arith.constant 0 : index
    %24 = vector.load %arg7[%c0_19, %c0_20, %c0_21] : memref<1x16x32xf32, #tpu.memory_space<vmem>>, vector<1x16x32xf32>
    %25 = vector.shape_cast %24 : vector<1x16x32xf32> to vector<16x32xf32>
    %26 = vector.shape_cast %23 : vector<16x32xf32> to vector<1x16x32xf32>
    tpu.vector_store %arg7[%c0_19, %c0_20, %c0_21], %26 {strides = array<i32>} : memref<1x16x32xf32, #tpu.memory_space<vmem>>, vector<1x16x32xf32>,
    return
  }
  func.func @transform_0(%arg0: i32, %arg1: i32) -> (i32, i32, i32) {
    %c0_i32 = arith.constant 0 : i32
    %c0_i32_0 = arith.constant 0 : i32
    return %arg0, %arg1, %c0_i32 : i32, i32, i32
  }
  func.func @transform_1(%arg0: i32, %arg1: i32) -> (i32, i32, i32) {
    %c1_i32 = arith.constant 1 : i32
    %0 = arith.addi %arg1, %c1_i32 : i32
    %c1_i32_0 = arith.constant 1 : i32
    %1 = arith.muli %0, %c1_i32_0 : i32
    %c0_i32 = arith.constant 0 : i32
    %c0_i32_1 = arith.constant 0 : i32
    return %arg0, %1, %c0_i32 : i32, i32, i32
  }
  func.func @transform_2(%arg0: i32, %arg1: i32) -> (i32, i32) {
    %c0_i32 = arith.constant 0 : i32
    %c0_i32_0 = arith.constant 0 : i32
    %c0_i32_1 = arith.constant 0 : i32
    return %c0_i32, %c0_i32_0 : i32, i32
  }
  func.func @transform_3(%arg0: i32, %arg1: i32) -> (i32, i32) {
    %c0_i32 = arith.constant 0 : i32
    %c0_i32_0 = arith.constant 0 : i32
    %c0_i32_1 = arith.constant 0 : i32
    return %c0_i32, %c0_i32_0 : i32, i32
  }
  func.func @transform_4(%arg0: i32, %arg1: i32) -> (i32, i32) {
    %c0_i32 = arith.constant 0 : i32
    %c0_i32_0 = arith.constant 0 : i32
    %c0_i32_1 = arith.constant 0 : i32
    return %c0_i32, %c0_i32_0 : i32, i32
  }
  func.func @transform_5(%arg0: i32, %arg1: i32) -> (i32, i32, i32) {
    %c0_i32 = arith.constant 0 : i32
    %c0_i32_0 = arith.constant 0 : i32
    return %arg0, %arg1, %c0_i32 : i32, i32, i32
  }
}

</mosaic_0001>

<llo_original>
// kernel: tpu_custom_call.1
$region0: #{tpu_custom_call.1}
  #allocation0 [shape = 'u32[]', space=smem, size = 0x4, offset = 0x4, fixed_abs, tag = 'smem constant byte address 0x4 - core index']
  #allocation1 [shape = 'u32[144,128]{1,0:T(1,128)}', space=vmem, size = 0x12000, scoped, tag = 'internal scratch']
  %s0 = inlined_call_operand.vmem [shape: bf16[2,32,64], index: 0, kind: input, shape index: {}]
  %s1 = inlined_call_operand.vmem [shape: bf16[2,32,64], index: 1, kind: input, shape index: {}]
  %s2 = inlined_call_operand.vmem [shape: bf16[64,128], index: 2, kind: input, shape index: {}]
  %s3 = inlined_call_operand.vmem [shape: bf16[64,128], index: 3, kind: input, shape index: {}]
  %s4 = inlined_call_operand.vmem [shape: f32[128,32], index: 4, kind: input, shape index: {}]
  %s5 = inlined_call_operand.hbm [shape: f32[2,16,32], index: 5, kind: output, shape index: {}]
  %s6 = sld [smem:[#allocation0]]
  $region53: #{tpu_custom_call.1} parent=0
    _
  %s8 = ssub.s32 1, %s6
  %s9 = scalar_select 0, %s8, %s6
  $region1: #{tpu_custom_call.1} parent=0
    #allocation2 [shape = 'u8[16384]{0}', space=vmem, size = 0x4000, scoped, tag = 'output window, operand 0']
    #allocation3 [shape = 's32[2]{0}', space=sflag, size = 0x8, scoped, tag = 'scoped memory for tpu_custom_call.1']
    %10 = vsyncpa [#allocation3], 0
    %s11 = scalar_lea.sflag [#allocation3], 1
    %12 = vsyncpa %s11, 0
    loop: start=0, step=1, limit=4
    $region2: #{tpu_custom_call.1} parent=1 // loop_pre_header
      _
    $region3: #{tpu_custom_call.1} parent=1 // loop_header
      %s14 = sphi 0, %s18
      %p15 = scmp.ge.s32.totalorder %s14, 4
      %s21 = sphi 0, %s33
      %s22 = sphi 0, %s29
      %s23 = sphi 0, %s21
      %s24 = sphi 0, %s22
      %s25 = sphi 0, %s23
      %s26 = sphi 0, %s24
      %s38 = sphi 0, %s40
      %s41 = sphi 0, %s38
      %s42 = sphi 0, %s41
      %s58 = sphi 0, %s42
      %s68 = sphi 0, %s70
      %s71 = sphi 0, %s68
      %s72 = sphi 0, %s71
      %s88 = sphi 0, %s72
      %s92 = sphi 0, %s92
      %s94 = sphi 0, %s92
      %s95 = sphi 0, %s94
      %s109 = sphi 0, %s95
      %s113 = sphi 0, %s113
      %s115 = sphi 0, %s113
      %s116 = sphi 0, %s115
      %s130 = sphi 0, %s116
      %s134 = sphi 0, %s134
      %s136 = sphi 0, %s134
      %s137 = sphi 0, %s136
      %s151 = sphi 0, %s137
      %s159 = sphi 0, %s161
      %s162 = sphi 0, %s159
      %s163 = sphi 0, %s162
      %s179 = sphi 0, %s163
    $region4: #{tpu_custom_call.1} parent=1 // loop_header_branch
      %17 = sbr.rel (%p15) target = $region8
    $region5: #{tpu_custom_call.1} parent=1 // loop_body
      %s19 = ssub.s32 %s14, 1
      %s20 = ssub.s32 %s14, 2
      %s27 = sadd.s32 1, %s22
      %p28 = scmp.ge.s32.totalorder %s27, 1
      %s29 = scalar_select %p28, 0, %s27
      %s30 = sadd.s32 1, %s21
      %s31 = scalar_select %p28, %s30, %s21
      %p32 = scmp.ge.s32.totalorder %s31, 2
      %s33 = scalar_select %p32, 0, %s31
      %s34 = ssub.s32 %s21, %s33
      %s35 = ssub.s32 %s22, %s29
      %s36 = sor.u32 %s34, %s35
      %p37 = scmp.eq.s32.totalorder %s36, 0
      %s39 = sadd.s32 %s38, 1
      %s40 = scalar_select %p37, %s38, %s39
      %p43 = pneg %p37
      %p44 = scmp.eq.s32.totalorder %s14, 1
      %p45 = por %p43, %p44
      %p46 = scmp.ne.s32.totalorder %s38, %s41
      %p47 = scmp.eq.s32.totalorder %s14, 0
      %p48 = por %p46, %p47
      %p49 = scmp.ne.s32.totalorder %s38, %s41
      %p50 = scmp.eq.s32.totalorder %s19, 1
      %p51 = por %p49, %p50
      %p52 = scmp.ne.s32.totalorder %s41, %s42
      %p53 = scmp.eq.s32.totalorder %s19, 0
      %p54 = por %p52, %p53
      %p55 = scmp.ne.s32.totalorder %s41, %s42
      %p56 = scmp.eq.s32.totalorder %s20, 1
      %p57 = por %p55, %p56
      %p59 = scmp.ne.s32.totalorder %s42, %s58
      %p60 = scmp.eq.s32.totalorder %s20, 0
      %p61 = por %p59, %p60
      %s62 = sadd.s32 %s22, 1
      %s63 = sadd.s32 %s29, 1
      %s64 = ssub.s32 %s21, %s33
      %s65 = ssub.s32 %s62, %s63
      %s66 = sor.u32 %s64, %s65
      %p67 = scmp.eq.s32.totalorder %s66, 0
      %s69 = sadd.s32 %s68, 1
      %s70 = scalar_select %p67, %s68, %s69
      %p73 = pneg %p67
      %p74 = scmp.eq.s32.totalorder %s14, 1
      %p75 = por %p73, %p74
      %p76 = scmp.ne.s32.totalorder %s68, %s71
      %p77 = scmp.eq.s32.totalorder %s14, 0
      %p78 = por %p76, %p77
      %p79 = scmp.ne.s32.totalorder %s68, %s71
      %p80 = scmp.eq.s32.totalorder %s19, 1
      %p81 = por %p79, %p80
      %p82 = scmp.ne.s32.totalorder %s71, %s72
      %p83 = scmp.eq.s32.totalorder %s19, 0
      %p84 = por %p82, %p83
      %p85 = scmp.ne.s32.totalorder %s71, %s72
      %p86 = scmp.eq.s32.totalorder %s20, 1
      %p87 = por %p85, %p86
      %p89 = scmp.ne.s32.totalorder %s72, %s88
      %p90 = scmp.eq.s32.totalorder %s20, 0
      %p91 = por %p89, %p90
      %s93 = sadd.s32 %s92, 1
      %p96 = scmp.eq.s32.totalorder %s14, 1
      %p97 = scmp.ne.s32.totalorder %s92, %s94
      %p98 = scmp.eq.s32.totalorder %s14, 0
      %p99 = por %p97, %p98
      %p100 = scmp.ne.s32.totalorder %s92, %s94
      %p101 = scmp.eq.s32.totalorder %s19, 1
      %p102 = por %p100, %p101
      %p103 = scmp.ne.s32.totalorder %s94, %s95
      %p104 = scmp.eq.s32.totalorder %s19, 0
      %p105 = por %p103, %p104
      %p106 = scmp.ne.s32.totalorder %s94, %s95
      %p107 = scmp.eq.s32.totalorder %s20, 1
      %p108 = por %p106, %p107
      %p110 = scmp.ne.s32.totalorder %s95, %s109
      %p111 = scmp.eq.s32.totalorder %s20, 0
      %p112 = por %p110, %p111
      %s114 = sadd.s32 %s113, 1
      %p117 = scmp.eq.s32.totalorder %s14, 1
      %p118 = scmp.ne.s32.totalorder %s113, %s115
      %p119 = scmp.eq.s32.totalorder %s14, 0
      %p120 = por %p118, %p119
      %p121 = scmp.ne.s32.totalorder %s113, %s115
      %p122 = scmp.eq.s32.totalorder %s19, 1
      %p123 = por %p121, %p122
      %p124 = scmp.ne.s32.totalorder %s115, %s116
      %p125 = scmp.eq.s32.totalorder %s19, 0
      %p126 = por %p124, %p125
      %p127 = scmp.ne.s32.totalorder %s115, %s116
      %p128 = scmp.eq.s32.totalorder %s20, 1
      %p129 = por %p127, %p128
      %p131 = scmp.ne.s32.totalorder %s116, %s130
      %p132 = scmp.eq.s32.totalorder %s20, 0
      %p133 = por %p131, %p132
      %s135 = sadd.s32 %s134, 1
      %p138 = scmp.eq.s32.totalorder %s14, 1
      %p139 = scmp.ne.s32.totalorder %s134, %s136
      %p140 = scmp.eq.s32.totalorder %s14, 0
      %p141 = por %p139, %p140
      %p142 = scmp.ne.s32.totalorder %s134, %s136
      %p143 = scmp.eq.s32.totalorder %s19, 1
      %p144 = por %p142, %p143
      %p145 = scmp.ne.s32.totalorder %s136, %s137
      %p146 = scmp.eq.s32.totalorder %s19, 0
      %p147 = por %p145, %p146
      %p148 = scmp.ne.s32.totalorder %s136, %s137
      %p149 = scmp.eq.s32.totalorder %s20, 1
      %p150 = por %p148, %p149
      %p152 = scmp.ne.s32.totalorder %s137, %s151
      %p153 = scmp.eq.s32.totalorder %s20, 0
      %p154 = por %p152, %p153
      %s155 = ssub.s32 %s21, %s33
      %s156 = ssub.s32 %s22, %s29
      %s157 = sor.u32 %s155, %s156
      %p158 = scmp.eq.s32.totalorder %s157, 0
      %s160 = sadd.s32 %s159, 1
      %s161 = scalar_select %p158, %s159, %s160
      %p164 = pneg %p158
      %p165 = scmp.eq.s32.totalorder %s14, 1
      %p166 = por %p164, %p165
      %p167 = scmp.ne.s32.totalorder %s159, %s162
      %p168 = scmp.eq.s32.totalorder %s14, 0
      %p169 = por %p167, %p168
      %p170 = scmp.ne.s32.totalorder %s159, %s162
      %p171 = scmp.eq.s32.totalorder %s19, 1
      %p172 = por %p170, %p171
      %p173 = scmp.ne.s32.totalorder %s162, %s163
      %p174 = scmp.eq.s32.totalorder %s19, 0
      %p175 = por %p173, %p174
      %p176 = scmp.ne.s32.totalorder %s162, %s163
      %p177 = scmp.eq.s32.totalorder %s20, 1
      %p178 = por %p176, %p177
      %p180 = scmp.ne.s32.totalorder %s163, %s179
      %p181 = scmp.eq.s32.totalorder %s20, 0
      %p182 = por %p180, %p181
      %p183 = scmp.le.s32.totalorder 1, %s14
      %p184 = scmp.lt.s32.totalorder %s14, 3
      %p185 = pnand %p183, %p184
      %p186 = pneg %p185
      // Predicated region
      $region9: #{tpu_custom_call.1} parent=5 // pred_check
        _
      $region10: #{tpu_custom_call.1} parent=5 // pred_check_branch
        %188 = sbr.rel (%p185) target = $region12
      $region11: #{tpu_custom_call.1} parent=5 // pred_region
        %s189 = ssub.s32 %s14, 1
        // Predicated region
        $region13: #{tpu_custom_call.1} parent=11 // pred_check
          %p190 = pneg %p105
        $region14: #{tpu_custom_call.1} parent=11 // pred_check_branch
          %192 = sbr.rel (%p190) target = $region16
        $region15: #{tpu_custom_call.1} parent=11 // pred_region
          _
        $region16: #{tpu_custom_call.1} parent=11 // pred_fallthru
          _
        // Predicated region
        $region17: #{tpu_custom_call.1} parent=11 // pred_check
          %p193 = pneg %p126
        $region18: #{tpu_custom_call.1} parent=11 // pred_check_branch
          %195 = sbr.rel (%p193) target = $region20
        $region19: #{tpu_custom_call.1} parent=11 // pred_region
          _
        $region20: #{tpu_custom_call.1} parent=11 // pred_fallthru
          _
        // Predicated region
        $region21: #{tpu_custom_call.1} parent=11 // pred_check
          %p196 = pneg %p147
        $region22: #{tpu_custom_call.1} parent=11 // pred_check_branch
          %198 = sbr.rel (%p196) target = $region24
        $region23: #{tpu_custom_call.1} parent=11 // pred_region
          _
        $region24: #{tpu_custom_call.1} parent=11 // pred_fallthru
          _
      $region12: #{tpu_custom_call.1} parent=5 // pred_fallthru
        _
      %p199 = scmp.lt.s32.totalorder %s14, 2
      // Predicated region
      $region25: #{tpu_custom_call.1} parent=5 // pred_check
        %p200 = pneg %p199
      $region26: #{tpu_custom_call.1} parent=5 // pred_check_branch
        %202 = sbr.rel (%p200) target = $region28
      $region27: #{tpu_custom_call.1} parent=5 // pred_region
        // Predicated region
        $region29: #{tpu_custom_call.1} parent=27 // pred_check
          %p203 = pneg %p48
        $region30: #{tpu_custom_call.1} parent=27 // pred_check_branch
          %205 = sbr.rel (%p203) target = $region32
        $region31: #{tpu_custom_call.1} parent=27 // pred_region
          %s206 = smul.u32 2, %s22
          %p207 = scmp.lt.s32.totalorder %s21, 1
          %s208 = scalar_select %p207, %s21, 1
          %p209 = scmp.lt.s32.totalorder %s206, 3
          %s210 = scalar_select %p209, %s206, 3
          %s211 = smul.addr %s208, 4
          %s212 = sadd.s32 %s210, %s211
          %s213 = smul.addr %s212, 4
          %s214 = scalar_lea.vmem %s0, %s213
          %s215 = smul.u32 2, %s22
        $region32: #{tpu_custom_call.1} parent=27 // pred_fallthru
          _
        // Predicated region
        $region33: #{tpu_custom_call.1} parent=27 // pred_check
          %p216 = pneg %p78
        $region34: #{tpu_custom_call.1} parent=27 // pred_check_branch
          %218 = sbr.rel (%p216) target = $region36
        $region35: #{tpu_custom_call.1} parent=27 // pred_region
          %s219 = sadd.s32 %s22, 1
          %s220 = smul.u32 2, %s219
          %p221 = scmp.lt.s32.totalorder %s21, 1
          %s222 = scalar_select %p221, %s21, 1
          %p223 = scmp.lt.s32.totalorder %s220, 3
          %s224 = scalar_select %p223, %s220, 3
          %s225 = smul.addr %s222, 4
          %s226 = sadd.s32 %s224, %s225
          %s227 = smul.addr %s226, 4
          %s228 = scalar_lea.vmem %s1, %s227
          %s229 = sadd.s32 %s22, 1
          %s230 = smul.u32 2, %s229
        $region36: #{tpu_custom_call.1} parent=27 // pred_fallthru
          _
      $region28: #{tpu_custom_call.1} parent=5 // pred_fallthru
        _
      %p231 = scmp.le.s32.totalorder 1, %s14
      %p232 = scmp.lt.s32.totalorder %s14, 3
      %p233 = pnand %p231, %p232
      %p234 = pneg %p233
      // Predicated region
      $region37: #{tpu_custom_call.1} parent=5 // pred_check
        _
      $region38: #{tpu_custom_call.1} parent=5 // pred_check_branch
        %236 = sbr.rel (%p233) target = $region40
      $region39: #{tpu_custom_call.1} parent=5 // pred_region
        %s237 = ssub.s32 %s14, 1
        %s238 = smul.u32 2, %s24
        %p239 = scmp.lt.s32.totalorder %s23, 1
        %s240 = scalar_select %p239, %s23, 1
        %p241 = scmp.lt.s32.totalorder %s238, 3
        %s242 = scalar_select %p241, %s238, 3
        %s243 = smul.addr %s240, 4
        %s244 = sadd.s32 %s242, %s243
        %s245 = smul.addr %s244, 4
        %s246 = scalar_lea.vmem %s0, %s245
        %p247 = pneg %p54
        %p248 = pneg %p51
        %s249 = sadd.s32 %s24, 1
        %s250 = smul.u32 2, %s249
        %p251 = scmp.lt.s32.totalorder %s23, 1
        %s252 = scalar_select %p251, %s23, 1
        %p253 = scmp.lt.s32.totalorder %s250, 3
        %s254 = scalar_select %p253, %s250, 3
        %s255 = smul.addr %s252, 4
        %s256 = sadd.s32 %s254, %s255
        %s257 = smul.addr %s256, 4
        %s258 = scalar_lea.vmem %s1, %s257
        %p259 = pneg %p84
        %p260 = pneg %p81
        %p261 = pneg %p105
        %p262 = pneg %p102
        %p263 = pneg %p126
        %p264 = pneg %p123
        %p265 = pneg %p147
        %p266 = pneg %p144
        %p267 = pneg %p175
        %p268 = pneg %p172
        %s269 = sand.u32 %s162, 1
        %s270 = scalar_lea.sflag [#allocation3], %s269
        %s271 = sand.u32 %s162, 1
        %s272 = smul.addr %s271, 16
        %s273 = scalar_lea.vmem [#allocation2], %s272
        %s274 = smul.u32 2, %s24
        %p275 = scmp.lt.s32.totalorder %s23, 1
        %s276 = scalar_select %p275, %s23, 1
        %p277 = scmp.lt.s32.totalorder %s274, 3
        %s278 = scalar_select %p277, %s274, 3
        %s279 = smul.addr %s276, 4
        %s280 = sadd.s32 %s278, %s279
        %s281 = smul.addr %s280, 4
        %s282 = scalar_lea.vmem %s0, %s281
        %s283 = smul.u32 2, %s24
        %s284 = sadd.s32 %s24, 1
        %s285 = smul.u32 2, %s284
        %p286 = scmp.lt.s32.totalorder %s23, 1
        %s287 = scalar_select %p286, %s23, 1
        %p288 = scmp.lt.s32.totalorder %s285, 3
        %s289 = scalar_select %p288, %s285, 3
        %s290 = smul.addr %s287, 4
        %s291 = sadd.s32 %s289, %s290
        %s292 = smul.addr %s291, 4
        %s293 = scalar_lea.vmem %s1, %s292
        %s294 = sadd.s32 %s24, 1
        %s295 = smul.u32 2, %s294
        %s296 = smul.u32 2, %s24
        %v298 = vld [vmem:[%s282] sm:$0xf]
        %v299 = vld [vmem:[%s282 + $0x4] sm:$0xf]
        %v300 = vld [vmem:[%s293] sm:$0xf]
        %v301 = vld [vmem:[%s293 + $0x4] sm:$0xf]
        %v302 = vld [vmem:[%s2] sm:$0xf]
        %v303 = vld [vmem:[%s2 + $0x4] sm:$0xf]
        %v304 = vld [vmem:[%s2 + $0x8] sm:$0xf]
        %v305 = vld [vmem:[%s2 + $0xc] sm:$0xf]
        %v306 = vld [vmem:[%s2 + $0x10] sm:$0xf]
        %v307 = vld [vmem:[%s2 + $0x14] sm:$0xf]
        %v308 = vld [vmem:[%s2 + $0x18] sm:$0xf]
        %v309 = vld [vmem:[%s2 + $0x1c] sm:$0xf]
        %v310 = vld [vmem:[%s3] sm:$0xf]
        %v311 = vld [vmem:[%s3 + $0x4] sm:$0xf]
        %v312 = vld [vmem:[%s3 + $0x8] sm:$0xf]
        %v313 = vld [vmem:[%s3 + $0xc] sm:$0xf]
        %v314 = vld [vmem:[%s3 + $0x10] sm:$0xf]
        %v315 = vld [vmem:[%s3 + $0x14] sm:$0xf]
        %v316 = vld [vmem:[%s3 + $0x18] sm:$0xf]
        %v317 = vld [vmem:[%s3 + $0x1c] sm:$0xf]
        %v320 = vunpack.c.l.b16 %v298
        %v321 = vunpack.c.l.b16 %v299
        %v322 = vpack.c.b16 %v321, %v320
        %v331 = vunpack.c.l.b16 %v310
        %v332 = vunpack.c.l.b16 %v311
        %v333 = vunpack.c.l.b16 %v312
        %v334 = vunpack.c.l.b16 %v313
        %v335 = vunpack.c.l.b16 %v314
        %v336 = vunpack.c.l.b16 %v315
        %v337 = vunpack.c.l.b16 %v316
        %v338 = vunpack.c.l.b16 %v317
        %v339 = vpack.c.b16 %v332, %v331
        %v340 = vpack.c.b16 %v334, %v333
        %v341 = vpack.c.b16 %v336, %v335
        %v342 = vpack.c.b16 %v338, %v337
        %vm347 = vcmask 523264
        %v349 = vsel %vm347, %v322, 0
        %351 = vmatprep.subr.bf16.mxu0 0
        %352 = vmatpush1.bf16.msra.mxu0 %v339
        %353 = vmatprep.subr.bf16.mxu0 0
        %354 = vmatpush1.bf16.msra.mxu0 %v340
        %355 = vmatprep.subr.bf16.mxu0 0
        %356 = vmatpush1.bf16.msra.mxu0 %v341
        %357 = vmatprep.subr.bf16.mxu0 0
        %358 = vmatpush1.bf16.msra.mxu0 %v342
        %359 = vmatprep.subr.bf16.mxu0 0
        %360 = vmatpush1.bf16.msra.mxu0 0
        %361 = vmatprep.subr.bf16.mxu0 0
        %362 = vmatpush1.bf16.msra.mxu0 0
        %363 = vmatprep.subr.bf16.mxu0 0
        %364 = vmatpush1.bf16.msra.mxu0 0
        %365 = vmatprep.subr.bf16.mxu0 0
        %366 = vmatpush1.bf16.msra.mxu0 0
        %367 = vmatprep.subr.bf16.mxu0 0
        %368 = vmatpush1.bf16.msra.mxu0 0
        %369 = vmatprep.subr.bf16.mxu0 0
        %370 = vmatpush1.bf16.msra.mxu0 0
        %371 = vmatprep.subr.bf16.mxu0 0
        %372 = vmatpush1.bf16.msra.mxu0 0
        %373 = vmatprep.subr.bf16.mxu0 0
        %374 = vmatpush1.bf16.msra.mxu0 0
        %375 = vmatprep.subr.bf16.mxu0 0
        %376 = vmatpush1.bf16.msra.mxu0 0
        %377 = vmatprep.subr.bf16.mxu0 0
        %378 = vmatpush1.bf16.msra.mxu0 0
        %379 = vmatprep.subr.bf16.mxu0 0
        %380 = vmatpush1.bf16.msra.mxu0 0
        %381 = vmatprep.subr.bf16.mxu0 0
        %382 = vmatpush1.bf16.msra.mxu0 0
        %383 = vmatprep.mubr.bf16.mxu0 0
        %384 = vmatmul.mubr.bf16.gmra.mrb[0].mxu0 %v349
        %v385 = vpop.f32.mrb[0].mxu0
        %v386 = vadd.f32 0.0, %v385
        %v387 = vpop.f32.mrb[0].mxu0
        %v388 = vpop.f32.mrb[0].mxu0
        %v389 = vadd.f32 0.0, %v388
        %v390 = vpop.f32.mrb[0].mxu0
        %391 = vdwg.mxu0
        %v394 = vunpack.c.l.b16 %v300
        %v395 = vunpack.c.l.b16 %v301
        %v396 = vpack.c.b16 %v395, %v394
        %v398 = vsel %vm347, %v396, 0
        %400 = vmatprep.subr.bf16.mxu0 0
        %401 = vmatpush1.bf16.msra.mxu0 %v339
        %402 = vmatprep.subr.bf16.mxu0 0
        %403 = vmatpush1.bf16.msra.mxu0 %v340
        %404 = vmatprep.subr.bf16.mxu0 0
        %405 = vmatpush1.bf16.msra.mxu0 %v341
        %406 = vmatprep.subr.bf16.mxu0 0
        %407 = vmatpush1.bf16.msra.mxu0 %v342
        %408 = vmatprep.subr.bf16.mxu0 0
        %409 = vmatpush1.bf16.msra.mxu0 0
        %410 = vmatprep.subr.bf16.mxu0 0
        %411 = vmatpush1.bf16.msra.mxu0 0
        %412 = vmatprep.subr.bf16.mxu0 0
        %413 = vmatpush1.bf16.msra.mxu0 0
        %414 = vmatprep.subr.bf16.mxu0 0
        %415 = vmatpush1.bf16.msra.mxu0 0
        %416 = vmatprep.subr.bf16.mxu0 0
        %417 = vmatpush1.bf16.msra.mxu0 0
        %418 = vmatprep.subr.bf16.mxu0 0
        %419 = vmatpush1.bf16.msra.mxu0 0
        %420 = vmatprep.subr.bf16.mxu0 0
        %421 = vmatpush1.bf16.msra.mxu0 0
        %422 = vmatprep.subr.bf16.mxu0 0
        %423 = vmatpush1.bf16.msra.mxu0 0
        %424 = vmatprep.subr.bf16.mxu0 0
        %425 = vmatpush1.bf16.msra.mxu0 0
        %426 = vmatprep.subr.bf16.mxu0 0
        %427 = vmatpush1.bf16.msra.mxu0 0
        %428 = vmatprep.subr.bf16.mxu0 0
        %429 = vmatpush1.bf16.msra.mxu0 0
        %430 = vmatprep.subr.bf16.mxu0 0
        %431 = vmatpush1.bf16.msra.mxu0 0
        %432 = vmatprep.mubr.bf16.mxu0 0
        %433 = vmatmul.mubr.bf16.gmra.mrb[0].mxu0 %v398
        %v434 = vpop.f32.mrb[0].mxu0
        %v435 = vadd.f32 0.0, %v434
        %v436 = vpop.f32.mrb[0].mxu0
        %v437 = vpop.f32.mrb[0].mxu0
        %v438 = vpop.f32.mrb[0].mxu0
        %439 = vdwg.mxu0
        %vm442 = vcmask 1046528
        %v443 = vrot.slane %v386, 1
        %v444 = vrot.slane %v389, 1
        %v445 = vsel %vm442, %v443, %v444
        %v449 = vrot.slane %v435, 1
        %v451 = vsel %vm442, %v444, %v449
        %v460 = vunpack.c.l.b16 %v302
        %v461 = vunpack.c.l.b16 %v303
        %v462 = vunpack.c.l.b16 %v304
        %v463 = vunpack.c.l.b16 %v305
        %v464 = vunpack.c.l.b16 %v306
        %v465 = vunpack.c.l.b16 %v307
        %v466 = vunpack.c.l.b16 %v308
        %v467 = vunpack.c.l.b16 %v309
        %v468 = vpack.c.b16 %v461, %v460
        %v469 = vpack.c.b16 %v463, %v462
        %v470 = vpack.c.b16 %v465, %v464
        %v471 = vpack.c.b16 %v467, %v466
        %476 = vmatprep.subr.bf16.mxu0 0
        %477 = vmatpush1.bf16.msra.mxu0 %v468
        %478 = vmatprep.subr.bf16.mxu0 0
        %479 = vmatpush1.bf16.msra.mxu0 %v469
        %480 = vmatprep.subr.bf16.mxu0 0
        %481 = vmatpush1.bf16.msra.mxu0 %v470
        %482 = vmatprep.subr.bf16.mxu0 0
        %483 = vmatpush1.bf16.msra.mxu0 %v471
        %484 = vmatprep.subr.bf16.mxu0 0
        %485 = vmatpush1.bf16.msra.mxu0 0
        %486 = vmatprep.subr.bf16.mxu0 0
        %487 = vmatpush1.bf16.msra.mxu0 0
        %488 = vmatprep.subr.bf16.mxu0 0
        %489 = vmatpush1.bf16.msra.mxu0 0
        %490 = vmatprep.subr.bf16.mxu0 0
        %491 = vmatpush1.bf16.msra.mxu0 0
        %492 = vmatprep.subr.bf16.mxu0 0
        %493 = vmatpush1.bf16.msra.mxu0 0
        %494 = vmatprep.subr.bf16.mxu0 0
        %495 = vmatpush1.bf16.msra.mxu0 0
        %496 = vmatprep.subr.bf16.mxu0 0
        %497 = vmatpush1.bf16.msra.mxu0 0
        %498 = vmatprep.subr.bf16.mxu0 0
        %499 = vmatpush1.bf16.msra.mxu0 0
        %500 = vmatprep.subr.bf16.mxu0 0
        %501 = vmatpush1.bf16.msra.mxu0 0
        %502 = vmatprep.subr.bf16.mxu0 0
        %503 = vmatpush1.bf16.msra.mxu0 0
        %504 = vmatprep.subr.bf16.mxu0 0
        %505 = vmatpush1.bf16.msra.mxu0 0
        %506 = vmatprep.subr.bf16.mxu0 0
        %507 = vmatpush1.bf16.msra.mxu0 0
        %508 = vmatprep.mubr.bf16.mxu0 0
        %509 = vmatmul.mubr.bf16.gmra.mrb[0].mxu0 %v349
        %v510 = vpop.f32.mrb[0].mxu0
        %v511 = vadd.f32 %v445, %v510
        %v512 = vpop.f32.mrb[0].mxu0
        %v513 = vpop.f32.mrb[0].mxu0
        %v514 = vadd.f32 %v451, %v513
        %v515 = vpop.f32.mrb[0].mxu0
        %516 = vdwg.mxu0
        %v517 = vmul.f32 %v511, %v511
        %v518 = vmul.f32 %v514, %v514
        %v519 = vld [vmem:[%s4] sm:$0xff]
        %v520 = vld [vmem:[%s4 + $0x8] sm:$0xff]
        %v521 = vld [vmem:[%s4 + $0x10] sm:$0xff]
        %v522 = vld [vmem:[%s4 + $0x18] sm:$0xff]
        %v523 = vld [vmem:[%s4 + $0x20] sm:$0xff]
        %v524 = vld [vmem:[%s4 + $0x28] sm:$0xff]
        %v525 = vld [vmem:[%s4 + $0x30] sm:$0xff]
        %v526 = vld [vmem:[%s4 + $0x38] sm:$0xff]
        %v527 = vld [vmem:[%s4 + $0x40] sm:$0xff]
        %v528 = vld [vmem:[%s4 + $0x48] sm:$0xff]
        %v529 = vld [vmem:[%s4 + $0x50] sm:$0xff]
        %v530 = vld [vmem:[%s4 + $0x58] sm:$0xff]
        %v531 = vld [vmem:[%s4 + $0x60] sm:$0xff]
        %v532 = vld [vmem:[%s4 + $0x68] sm:$0xff]
        %v533 = vld [vmem:[%s4 + $0x70] sm:$0xff]
        %v534 = vld [vmem:[%s4 + $0x78] sm:$0xff]
        %535 = vmatprep.subr.mxu0 0.0
        %536 = vmatpush1.msra.mxu0 %v519
        %537 = vmatprep.subr.mxu0 0.0
        %538 = vmatpush1.msra.mxu0 %v520
        %539 = vmatprep.subr.mxu0 0.0
        %540 = vmatpush1.msra.mxu0 %v521
        %541 = vmatprep.subr.mxu0 0.0
        %542 = vmatpush1.msra.mxu0 %v522
        %543 = vmatprep.subr.mxu0 0.0
        %544 = vmatpush1.msra.mxu0 %v523
        %545 = vmatprep.subr.mxu0 0.0
        %546 = vmatpush1.msra.mxu0 %v524
        %547 = vmatprep.subr.mxu0 0.0
        %548 = vmatpush1.msra.mxu0 %v525
        %549 = vmatprep.subr.mxu0 0.0
        %550 = vmatpush1.msra.mxu0 %v526
        %551 = vmatprep.subr.mxu0 0.0
        %552 = vmatpush1.msra.mxu0 %v527
        %553 = vmatprep.subr.mxu0 0.0
        %554 = vmatpush1.msra.mxu0 %v528
        %555 = vmatprep.subr.mxu0 0.0
        %556 = vmatpush1.msra.mxu0 %v529
        %557 = vmatprep.subr.mxu0 0.0
        %558 = vmatpush1.msra.mxu0 %v530
        %559 = vmatprep.subr.mxu0 0.0
        %560 = vmatpush1.msra.mxu0 %v531
        %561 = vmatprep.subr.mxu0 0.0
        %562 = vmatpush1.msra.mxu0 %v532
        %563 = vmatprep.subr.mxu0 0.0
        %564 = vmatpush1.msra.mxu0 %v533
        %565 = vmatprep.subr.mxu0 0.0
        %566 = vmatpush1.msra.mxu0 %v534
        %567 = vmatprep.subr.mxu0 0.0
        %568 = vmatpush1.msra.mxu0 0.0
        %569 = vmatprep.subr.mxu0 0.0
        %570 = vmatpush1.msra.mxu0 0.0
        %571 = vmatprep.subr.mxu0 0.0
        %572 = vmatpush1.msra.mxu0 0.0
        %573 = vmatprep.subr.mxu0 0.0
        %574 = vmatpush1.msra.mxu0 0.0
        %575 = vmatprep.subr.mxu0 0.0
        %576 = vmatpush1.msra.mxu0 0.0
        %577 = vmatprep.subr.mxu0 0.0
        %578 = vmatpush1.msra.mxu0 0.0
        %579 = vmatprep.subr.mxu0 0.0
        %580 = vmatpush1.msra.mxu0 0.0
        %581 = vmatprep.subr.mxu0 0.0
        %582 = vmatpush1.msra.mxu0 0.0
        %583 = vmatprep.subr.mxu0 0.0
        %584 = vmatpush1.msra.mxu0 0.0
        %585 = vmatprep.subr.mxu0 0.0
        %586 = vmatpush1.msra.mxu0 0.0
        %587 = vmatprep.subr.mxu0 0.0
        %588 = vmatpush1.msra.mxu0 0.0
        %589 = vmatprep.subr.mxu0 0.0
        %590 = vmatpush1.msra.mxu0 0.0
        %591 = vmatprep.subr.mxu0 0.0
        %592 = vmatpush1.msra.mxu0 0.0
        %593 = vmatprep.subr.mxu0 0.0
        %594 = vmatpush1.msra.mxu0 0.0
        %595 = vmatprep.subr.mxu0 0.0
        %596 = vmatpush1.msra.mxu0 0.0
        %597 = vmatprep.subr.mxu0 0.0
        %598 = vmatpush1.msra.mxu0 0.0
        %599 = vmatprep.mubr.f32.mxu0 0.0
        %600 = vmatmul.mubr.f32.gmra.mrb[0].mxu0 %v517
        %v601 = vpop.f32.mrb[0].mxu0
        %v602 = vadd.f32 0.0, %v601
        %v603 = vpop.f32.mrb[0].mxu0
        %604 = vmatprep.mubr.f32.mxu0 0.0
        %605 = vmatmul.mubr.f32.gmra.mrb[0].mxu0 %v518
        %v606 = vpop.f32.mrb[0].mxu0
        %v607 = vadd.f32 0.0, %v606
        %v608 = vpop.f32.mrb[0].mxu0
        %609 = vdwg.mxu0
        %v610 = vmax.f32 %v602, 1e-10
        %v611 = vmax.f32 %v607, 1e-10
        %v612 = vlog2.pop %v610
        %v613 = vmul.f32 %v612, 0.6931472
        %v614 = vlog2.pop %v611
        %v615 = vmul.f32 %v614, 0.6931472
        %v616 = vmul.f32 %v613, 0.4342945
        %v617 = vmul.f32 %v615, 0.4342945
        %v618 = vmul.f32 %v616, 10.0
        %v619 = vmul.f32 %v617, 10.0
        %vm620 = vcmask 261120
        %621 = vst.msk [vmem:[%s273] sm:$0xff] %vm620, %v618
        %622 = vst.msk [vmem:[%s273 + $0x8] sm:$0xff] %vm620, %v619
        %s623 = sand.u32 %s162, 1
        %s624 = scalar_lea.sflag [#allocation3], %s623
        %s625 = sand.u32 %s162, 1
        %s626 = smul.addr %s625, 16
        %s627 = scalar_lea.vmem [#allocation2], %s626
        // Predicated region
        $region41: #{tpu_custom_call.1} parent=39 // pred_check
          %p628 = pneg %p172
        $region42: #{tpu_custom_call.1} parent=39 // pred_check_branch
          %630 = sbr.rel (%p628) target = $region44
        $region43: #{tpu_custom_call.1} parent=39 // pred_region
          %s631 = smul.u32 2, %s24
          %s633 = ssub.s32 256, 256
          %634 = vsyncadd %s624, %s633
          %s635 = smul.addr %s23, 2
          %s636 = sadd.s32 %s631, %s635
          %s637 = smul.addr %s636, 128
          %s638 = scalar_lea.hbm %s5, %s637
          %s639 = sshll.u32 %s627, 4
          %s640 = int_to_ptr.vmem [resolvable:$true] %s639
          %645 = dma.vmem_to_hbm [thread:$0]  %s640, 256, %s638, %s624, 128, 128, 8
        $region44: #{tpu_custom_call.1} parent=39 // pred_fallthru
          _
      $region40: #{tpu_custom_call.1} parent=5 // pred_fallthru
        _
      %p646 = scmp.le.s32.totalorder 2, %s14
      // Predicated region
      $region45: #{tpu_custom_call.1} parent=5 // pred_check
        %p647 = pneg %p646
      $region46: #{tpu_custom_call.1} parent=5 // pred_check_branch
        %649 = sbr.rel (%p647) target = $region48
      $region47: #{tpu_custom_call.1} parent=5 // pred_region
        %s650 = ssub.s32 %s14, 2
        // Predicated region
        $region49: #{tpu_custom_call.1} parent=47 // pred_check
          %p651 = pneg %p178
        $region50: #{tpu_custom_call.1} parent=47 // pred_check_branch
          %653 = sbr.rel (%p651) target = $region52
        $region51: #{tpu_custom_call.1} parent=47 // pred_region
          %s654 = sand.u32 %s163, 1
          %s655 = scalar_lea.sflag [#allocation3], %s654
          %s656 = sand.u32 %s163, 1
          %s657 = smul.addr %s656, 16
          %s658 = scalar_lea.vmem [#allocation2], %s657
          %659 = dma.done %s655, 256
        $region52: #{tpu_custom_call.1} parent=47 // pred_fallthru
          _
      $region48: #{tpu_custom_call.1} parent=5 // pred_fallthru
        _
    $region6: #{tpu_custom_call.1} parent=1 // loop_footer
      %s18 = sadd.s32 1, %s14
    $region7: #{tpu_custom_call.1} parent=1 // loop_footer_branch
      %13 = sbr.rel target = $region3
    $region8: #{tpu_custom_call.1} parent=1 // loop_exit
      _
    %660 = vsyncpa [#allocation3], 1
    %s661 = scalar_lea.sflag [#allocation3], 1
    %662 = vsyncpa %s661, 1

</llo_original>
